<compile_context>
chip_gen: v5e
topology: v5e:2x2
jax: 0.10.0
libtpu: 0.0.40
codegen_flags: <defaults>
</compile_context>

<pallas_src>
import jax
import jax.numpy as jnp
from jax.experimental import pallas as pl
from jax.experimental.pallas import tpu as pltpu


def _round_up(x, m):
    return ((x + m - 1) // m) * m


def _location_kernel(cols_ref, w_ref, o_ref):
    # cols_ref: [tile_m, 2K]   w_ref: [2K, A] (VMEM-resident)   o_ref: [tile_m, A]
    # Single MXU matmul, f32 accumulation, one store in the final dtype.
    o_ref[...] = jnp.dot(
        cols_ref[...], w_ref[...], preferred_element_type=jnp.float32
    ).astype(o_ref.dtype)


def fuse_location_weights(conv_w, dense_w, dtype=jnp.float32):
    """W_fused[j*2 + c, a] = sum_f conv_w[f, c, j] * dense_w[a, f]  ->  [2K, A].

    Precompute this once for inference and reuse with location_layer_fused().
    """
    F_, C, K = conv_w.shape
    wconv_mat = jnp.transpose(conv_w, (2, 1, 0)).reshape(K * C, F_)       # [2K, F]
    return jnp.dot(wconv_mat, dense_w.T,
                   preferred_element_type=jnp.float32).astype(dtype)      # [2K, A]


@jax.jit
def location_layer_fused(attention_weights_cat, w_fused):
    """attention_weights_cat: [B, 2, T] (NCW), w_fused: [2K, A]  ->  [B, T, A]."""
    B, C, T = attention_weights_cat.shape
    twoK, A = w_fused.shape
    K = twoK // C
    assert K % 2 == 1, "LocationLayer kernel requires an odd kernel_size"
    pad = (K - 1) // 2
    dtype = attention_weights_cat.dtype

    # ---- im2col glue (fused by jit into one XLA fusion, in the input dtype) ----
    x_pad = jnp.pad(attention_weights_cat, ((0, 0), (0, 0), (pad, pad)))   # [B,2,T+2p]
    # shifted[b, c, t, j] = x_pad[b, c, t + j]
    shifted = jnp.stack([x_pad[:, :, j:j + T] for j in range(K)], axis=-1)  # [B,2,T,K]
    # cols[b*T + t, j*2 + c] = x_pad[b, c, t + j]
    cols = jnp.transpose(shifted, (0, 2, 3, 1)).reshape(B * T, twoK)        # [M, 2K]

    # ---- tiling: big tiles, >= 2 grid steps on large problems (v7x megacore) ----
    M = B * T
    M16 = _round_up(M, 16)
    if M16 <= 2048:
        tile_m = M16
    else:
        tile_m = min(2048, _round_up(pl.cdiv(M16, 2), 16))
    M_pad = _round_up(M, tile_m)
    if M_pad != M:
        cols = jnp.pad(cols, ((0, M_pad - M), (0, 0)))

    w_fused = w_fused.astype(dtype)

    out = pl.pallas_call(
        _location_kernel,
        out_shape=jax.ShapeDtypeStruct((M_pad, A), dtype),
        grid=(M_pad // tile_m,),
        in_specs=[
            pl.BlockSpec((tile_m, twoK), lambda i: (i, 0)),
            pl.BlockSpec((twoK, A), lambda i: (0, 0)),   # constant index -> resident
        ],
        out_specs=pl.BlockSpec((tile_m, A), lambda i: (i, 0)),
        compiler_params=pltpu.CompilerParams(
            dimension_semantics=("parallel",)),
    )(cols, w_fused)

    if M_pad != M:
        out = out[:M]
    return out.reshape(B, T, A)


@jax.jit
def location_layer(attention_weights_cat, conv_w, dense_w):
    """Full PyTorch-equivalent forward: conv_w [F,2,K], dense_w [A,F]."""
    w_fused = fuse_location_weights(conv_w, dense_w,
                                    dtype=attention_weights_cat.dtype)
    return location_layer_fused(attention_weights_cat, w_fused)


def location_layer_ref(x, conv_w, dense_w):
    """Pure-JAX f32 reference matching PyTorch exactly."""
    pad = (conv_w.shape[2] - 1) // 2
    conv = jax.lax.conv_general_dilated(
        x, conv_w, window_strides=(1,), padding=[(pad, pad)],
        dimension_numbers=("NCH", "OIH", "NCH"))                  # [B, F, T]
    return jnp.einsum("bft,af->bta", conv, dense_w)               # [B, T, A]


if __name__ == "__main__":
    B, T = 2, 16
    n_filters, kernel_size, attention_dim = 8, 5, 32

    key = jax.random.PRNGKey(0)
    k1, k2, k3 = jax.random.split(key, 3)
    attention_weights_cat = jax.random.normal(k1, (B, 2, T), dtype=jnp.float32)
    conv_w = jax.random.normal(k2, (n_filters, 2, kernel_size), dtype=jnp.float32) * 0.1
    dense_w = jax.random.normal(k3, (attention_dim, n_filters), dtype=jnp.float32) * 0.1

    out = jax.block_until_ready(
        location_layer(attention_weights_cat, conv_w, dense_w))

    ref = location_layer_ref(attention_weights_cat, conv_w, dense_w)
    assert out.shape == (B, T, attention_dim), out.shape
    assert out.dtype == attention_weights_cat.dtype, out.dtype
    # f32 end-to-end now (MXU default precision may still use bf16 passes),
    # so a 1e-2 tolerance is very conservative.
    err = float(jnp.max(jnp.abs(out - ref)))
    assert jnp.allclose(out, ref, atol=1e-2, rtol=1e-2), err

    print("KERNEL_OK")
</pallas_src>

<mosaic_0001>
module attributes {stable_mosaic.version = 11 : i64} {
  func.func @_location_kernel(%arg0: i32, %arg1: memref<32x10xf32, #tpu.memory_space<vmem>>, %arg2: memref<10x32xf32, #tpu.memory_space<vmem>>, %arg3: memref<32x32xf32, #tpu.memory_space<vmem>>) attributes {dimension_semantics = [#tpu.dimension_semantics<parallel>], iteration_bounds = array<i64: 1>, scalar_prefetch = 0 : i64, scratch_operands = 0 : i64, tpu.core_type = #tpu.core_type<tc>, window_params = [{transform_indices = @transform_0, window_bounds = array<i64: 32, 10>}, {pipeline_mode = #tpu.pipeline_mode<synchronous>, transform_indices = @transform_1, window_bounds = array<i64: 10, 32>}, {transform_indices = @transform_2, window_bounds = array<i64: 32, 32>}]} {
    %c0 = arith.constant 0 : index
    %c0_0 = arith.constant 0 : index
    %0 = vector.load %arg1[%c0, %c0_0] : memref<32x10xf32, #tpu.memory_space<vmem>>, vector<32x10xf32>
    %c0_1 = arith.constant 0 : index
    %c0_2 = arith.constant 0 : index
    %1 = vector.load %arg2[%c0_1, %c0_2] : memref<10x32xf32, #tpu.memory_space<vmem>>, vector<10x32xf32>
    %cst = arith.constant dense<0.000000e+00> : vector<32x32xf32>
    %2 = tpu.matmul %0, %1, %cst {dimension_numbers = #tpu.dot_dimension_numbers<[1], [0], [0], [1], [0, 0, 1, 1], [], []>} : vector<32x10xf32>, vector<10x32xf32>, vector<32x32xf32> -> vector<32x32xf32>
    %c0_3 = arith.constant 0 : index
    %c0_4 = arith.constant 0 : index
    %3 = vector.load %arg3[%c0_3, %c0_4] : memref<32x32xf32, #tpu.memory_space<vmem>>, vector<32x32xf32>
    tpu.vector_store %arg3[%c0_3, %c0_4], %2 {strides = array<i32>} : memref<32x32xf32, #tpu.memory_space<vmem>>, vector<32x32xf32>,
    return
  }
  func.func @transform_0(%arg0: i32) -> (i32, i32) {
    %c0_i32 = arith.constant 0 : i32
    %c0_i32_0 = arith.constant 0 : i32
    return %arg0, %c0_i32 : i32, i32
  }
  func.func @transform_1(%arg0: i32) -> (i32, i32) {
    %c0_i32 = arith.constant 0 : i32
    %c0_i32_0 = arith.constant 0 : i32
    %c0_i32_1 = arith.constant 0 : i32
    return %c0_i32, %c0_i32_0 : i32, i32
  }
  func.func @transform_2(%arg0: i32) -> (i32, i32) {
    %c0_i32 = arith.constant 0 : i32
    %c0_i32_0 = arith.constant 0 : i32
    return %arg0, %c0_i32 : i32, i32
  }
}

</mosaic_0001>

<llo_original>
// kernel: location_layer_fused.1
$region0: #{location_layer_fused.1}
  #allocation0 [shape = 'u32[]', space=smem, size = 0x4, offset = 0x4, fixed_abs, tag = 'smem constant byte address 0x4 - core index']
  #allocation1 [shape = 'u32[72,128]{1,0:T(1,128)}', space=vmem, size = 0x9000, scoped, tag = 'internal scratch']
  %s0 = inlined_call_operand.vmem [shape: f32[32,10], index: 0, kind: input, shape index: {}]
  %s1 = inlined_call_operand.vmem [shape: f32[10,32], index: 1, kind: input, shape index: {}]
  %s2 = inlined_call_operand.hbm [shape: f32[32,32], index: 2, kind: output, shape index: {}]
  %s3 = sld [smem:[#allocation0]]
  $region18: #{location_layer_fused.1} parent=0
    _
  %s5 = ssub.s32 1, %s3
  %s6 = scalar_select 0, %s5, %s3
  $region1: #{location_layer_fused.1} parent=0
    #allocation2 [shape = 'u8[16384]{0}', space=vmem, size = 0x4000, scoped, tag = 'output window, operand 0, single buffered']
    #allocation3 [shape = 's32[1]{0}', space=sflag, size = 0x4, scoped, tag = 'scoped memory for location_layer_fused.1']
    %7 = vsyncpa [#allocation3], 0
    // Predicated region
    $region2: #{location_layer_fused.1} parent=1 // pred_check
      _
    $region3: #{location_layer_fused.1} parent=1 // pred_check_branch
      %9 = sbr.rel (0) target = $region5
    $region4: #{location_layer_fused.1} parent=1 // pred_region
      _
    $region5: #{location_layer_fused.1} parent=1 // pred_fallthru
      _
    // Predicated region
    $region6: #{location_layer_fused.1} parent=1 // pred_check
      _
    $region7: #{location_layer_fused.1} parent=1 // pred_check_branch
      %11 = sbr.rel (0) target = $region9
    $region8: #{location_layer_fused.1} parent=1 // pred_region
      _
    $region9: #{location_layer_fused.1} parent=1 // pred_fallthru
      _
    %v12 = vld [vmem:[%s0] sm:$0xff]
    %v13 = vld [vmem:[%s0 + $0x8] sm:$0xff]
    %v14 = vld [vmem:[%s0 + $0x10] sm:$0xff]
    %v15 = vld [vmem:[%s0 + $0x18] sm:$0xff]
    %v16 = vld [vmem:[%s1] sm:$0xff]
    %v17 = vld [vmem:[%s1 + $0x8] sm:$0x3]
    %vm18 = vcmask 80896
    %v20 = vsel %vm18, %v12, 0
    %v23 = vsel %vm18, %v13, 0
    %v26 = vsel %vm18, %v14, 0
    %v29 = vsel %vm18, %v15, 0
    %vm31 = vcmask 1041408
    %v33 = vsel %vm31, %v17, 0
    %35 = vmatpush.msra.mxu0 0.0
    %36 = vmatpush.msra.mxu0 0.0
    %37 = vmatpush.msra.mxu0 0.0
    %38 = vmatpush.msra.mxu0 0.0
    %39 = vmatpush.msra.mxu0 0.0
    %40 = vmatpush.msra.mxu0 0.0
    %41 = vmatpush.msra.mxu0 0.0
    %42 = vmatpush.msra.mxu0 0.0
    %43 = vmatpush.msra.mxu0 0.0
    %44 = vmatpush.msra.mxu0 0.0
    %45 = vmatpush.msra.mxu0 0.0
    %46 = vmatpush.msra.mxu0 0.0
    %47 = vmatpush.msra.mxu0 0.0
    %48 = vmatpush.msra.mxu0 0.0
    %49 = vmatpush.msra.mxu0 %v33
    %50 = vmatpush.msra.mxu0 %v16
    %51 = vmatmul.f32.gmra.mxu0 %v20
    %v52 = vpop.f32.mrf.mxu0
    %v53 = vadd.f32 0.0, %v52
    %54 = vmatmul.f32.gmra.mxu0 %v23
    %v55 = vpop.f32.mrf.mxu0
    %v56 = vadd.f32 0.0, %v55
    %57 = vmatmul.f32.gmra.mxu0 %v26
    %v58 = vpop.f32.mrf.mxu0
    %v59 = vadd.f32 0.0, %v58
    %60 = vmatmul.f32.gmra.mxu0 %v29
    %v61 = vpop.f32.mrf.mxu0
    %v62 = vadd.f32 0.0, %v61
    %63 = vdwg.mxu0
    %vm64 = vcmask 261120
    %65 = vst.msk [vmem:[#allocation2] sm:$0xff] %vm64, %v53
    %66 = vst.msk [vmem:[#allocation2 + $0x8] sm:$0xff] %vm64, %v56
    %67 = vst.msk [vmem:[#allocation2 + $0x10] sm:$0xff] %vm64, %v59
    %68 = vst.msk [vmem:[#allocation2 + $0x18] sm:$0xff] %vm64, %v62
    // Predicated region
    $region10: #{location_layer_fused.1} parent=1 // pred_check
      _
    $region11: #{location_layer_fused.1} parent=1 // pred_check_branch
      %70 = sbr.rel (0) target = $region13
    $region12: #{location_layer_fused.1} parent=1 // pred_region
      %72 = vsyncadd [#allocation3], 0
      %s73 = sshll.u32 [#allocation2], 4
      %s74 = int_to_ptr.vmem [resolvable:$true] %s73
      %s75 = sshll.u32 %s2, 4
      %s76 = int_to_ptr.hbm [resolvable:$true] %s75
      %81 = dma.vmem_to_hbm [thread:$0]  %s74, 512, %s76, [#allocation3], 128, 128, 8
    $region13: #{location_layer_fused.1} parent=1 // pred_fallthru
      _
    // Predicated region
    $region14: #{location_layer_fused.1} parent=1 // pred_check
      _
    $region15: #{location_layer_fused.1} parent=1 // pred_check_branch
      %83 = sbr.rel (0) target = $region17
    $region16: #{location_layer_fused.1} parent=1 // pred_region
      %85 = dma.done [#allocation3], 512
    $region17: #{location_layer_fused.1} parent=1 // pred_fallthru
      _
    %86 = vsyncpa [#allocation3], 1

</llo_original>
